<compile_context>
chip_gen: v7x
topology: tpu7x:2x2x1
jax: 0.10.0
libtpu: 0.0.40
codegen_flags: <defaults>
</compile_context>

<pallas_src>
import math
import functools

import jax
import jax.numpy as jnp
from jax import lax
from jax.experimental import pallas as pl
from jax.experimental.pallas import tpu as pltpu


def _round_up(x, m):
    return ((x + m - 1) // m) * m


def _pad_axis(x, axis, target):
    size = x.shape[axis]
    if size == target:
        return x
    widths = [(0, 0)] * x.ndim
    widths[axis] = (0, target - size)
    return jnp.pad(x, widths)


def _biaffine_kernel(u_ref, xr_ref, left_ref, right_ref, out_ref):
    # scores = u @ x_r^T, expressed as a contracted-last-dim dot_general so no
    # explicit transpose of x_r is materialized.
    scores = lax.dot_general(
        u_ref[0], xr_ref[0],
        dimension_numbers=(((1,), (1,)), ((), ())),
        preferred_element_type=jnp.float32)                      # (TL, TR) f32
    # left: (TL, 1) lane-broadcast; right (incl. all scalar biases): (1, TR)
    # sublane-broadcast.  Cheap VPU adds hidden under the MXU matmul.
    out_ref[0] = (scores + left_ref[0] + right_ref[0]).astype(out_ref.dtype)


@functools.partial(
    jax.jit,
    static_argnames=("tile_l", "tile_r", "compute_dtype", "out_dtype"))
def biaffine_forward(x_l, x_r, matrix, lin_l_w, lin_l_b, lin_r_w, lin_r_b, bias,
                     *, tile_l=256, tile_r=256,
                     compute_dtype=jnp.float32, out_dtype=jnp.float32):
    B, L, dim_left = x_l.shape
    _, R, dim_right = x_r.shape
    del dim_left  # contracted away in the host-side precompute

    f32 = jnp.float32

    # ---- host-side (plain XLA) precompute -------------------------------
    # u = x_l @ matrix, plus the two rank-1 linear terms.  Keeping these out
    # of the kernel frees VMEM, balances the pipeline and lets the R grid
    # axis be "parallel".
    u = jnp.einsum("bld,de->ble", x_l.astype(f32), matrix.astype(f32))       # (B, L, DRr)
    left = jnp.einsum("bld,od->blo", x_l.astype(f32), lin_l_w.astype(f32))   # (B, L, 1)
    right = jnp.einsum("brd,od->bor", x_r.astype(f32), lin_r_w.astype(f32))  # (B, 1, R)
    # Fold all three scalar biases into the lane-dense `right` row.
    bias_sum = (bias.reshape(()) + lin_l_b.reshape(()) + lin_r_b.reshape(())
                ).astype(f32)
    right = right + bias_sum

    # ---- lane-dense padding ----------------------------------------------
    DR = _round_up(dim_right, 128)
    sub = 16 if compute_dtype == jnp.bfloat16 else 8   # bf16 packs 16 sublanes
    TL = min(tile_l, _round_up(L, sub))
    TR = min(tile_r, _round_up(R, 128))
    Lp = _round_up(L, TL)
    Rp = _round_up(R, TR)

    u_p = _pad_axis(_pad_axis(u, 2, DR), 1, Lp).astype(compute_dtype)        # (B, Lp, DR)
    xr_p = _pad_axis(_pad_axis(x_r.astype(f32), 2, DR), 1, Rp
                     ).astype(compute_dtype)                                 # (B, Rp, DR)
    left_p = _pad_axis(left, 1, Lp)                                          # (B, Lp, 1)  f32
    right_p = _pad_axis(right, 2, Rp)                                        # (B, 1, Rp)  f32

    grid = (B, Lp // TL, Rp // TR)

    out_padded = pl.pallas_call(
        _biaffine_kernel,
        out_shape=jax.ShapeDtypeStruct((B, Lp, Rp), out_dtype),
        grid_spec=pltpu.PrefetchScalarGridSpec(
            num_scalar_prefetch=0,
            grid=grid,
            in_specs=[
                # u: block index ignores the R axis -> resident across j.
                pl.BlockSpec((1, TL, DR), lambda b, i, j: (b, i, 0)),
                # x_r: block index ignores the L axis.
                pl.BlockSpec((1, TR, DR), lambda b, i, j: (b, j, 0)),
                # linear_l(x_l) column, resident across j.
                pl.BlockSpec((1, TL, 1), lambda b, i, j: (b, i, 0)),
                # linear_r(x_r) row (+ folded scalar biases), resident across i.
                pl.BlockSpec((1, 1, TR), lambda b, i, j: (b, 0, j)),
            ],
            out_specs=pl.BlockSpec((1, TL, TR), lambda b, i, j: (b, i, j)),
        ),
        compiler_params=pltpu.CompilerParams(
            # No scratch carry anywhere -> all axes parallel (megacore-friendly).
            dimension_semantics=("parallel", "parallel", "parallel"),
            # 48 MiB: headroom under v7x's 64 MiB physical VMEM, > v5e/v6e
            # scoped defaults; per-step working set is only a few MiB even at
            # 512-class tiles.
            vmem_limit_bytes=48 * 1024 * 1024,
        ),
    )(u_p, xr_p, left_p, right_p)

    # Padded rows/cols contain garbage (left + biases); always slice.
    return out_padded[:, :L, :R]


def init_params(key, dim_left, dim_right):
    k1, k2, k3, k4, k5 = jax.random.split(key, 5)
    # nn.init.xavier_uniform_(matrix)
    bound_m = math.sqrt(6.0 / (dim_left + dim_right))
    matrix = jax.random.uniform(k1, (dim_left, dim_right), jnp.float32,
                                -bound_m, bound_m)
    # bias init to 0
    bias = jnp.zeros((1,), jnp.float32)
    # nn.Linear default init: U(-1/sqrt(fan_in), 1/sqrt(fan_in))
    bl = 1.0 / math.sqrt(dim_left)
    lin_l_w = jax.random.uniform(k2, (1, dim_left), jnp.float32, -bl, bl)
    lin_l_b = jax.random.uniform(k3, (1,), jnp.float32, -bl, bl)
    br = 1.0 / math.sqrt(dim_right)
    lin_r_w = jax.random.uniform(k4, (1, dim_right), jnp.float32, -br, br)
    lin_r_b = jax.random.uniform(k5, (1,), jnp.float32, -br, br)
    return matrix, lin_l_w, lin_l_b, lin_r_w, lin_r_b, bias


def biaffine_ref(x_l, x_r, matrix, lin_l_w, lin_l_b, lin_r_w, lin_r_b, bias):
    x = jnp.einsum("bld,de->ble", x_l, matrix)
    x = jnp.einsum("ble,bre->blr", x, x_r) + bias[0]
    left = jnp.einsum("bld,od->blo", x_l, lin_l_w) + lin_l_b   # (B, L, 1)
    right = jnp.einsum("brd,od->bro", x_r, lin_r_w) + lin_r_b  # (B, R, 1)
    return x + left + jnp.transpose(right, (0, 2, 1))


if __name__ == "__main__":
    key = jax.random.PRNGKey(0)
    kx, kp, kx2, kp2 = jax.random.split(key, 4)

    # Small canonical shapes consistent with the module.
    B, L, R = 2, 8, 8
    dim_left, dim_right = 32, 32
    kxl, kxr = jax.random.split(kx)
    x_l = jax.random.normal(kxl, (B, L, dim_left), jnp.float32)
    x_r = jax.random.normal(kxr, (B, R, dim_right), jnp.float32)
    params = init_params(kp, dim_left, dim_right)

    out = biaffine_forward(x_l, x_r, *params)
    out = jax.block_until_ready(out)
    ref = biaffine_ref(x_l, x_r, *params)
    assert out.shape == (B, L, R)
    assert jnp.allclose(out, ref, atol=1e-4, rtol=1e-4), "mismatch vs reference"

    # Ragged shapes exercising padding + multiple R tiles.
    B2, L2, R2 = 2, 9, 200
    dl2, dr2 = 48, 40
    kxl2, kxr2 = jax.random.split(kx2)
    x_l2 = jax.random.normal(kxl2, (B2, L2, dl2), jnp.float32)
    x_r2 = jax.random.normal(kxr2, (B2, R2, dr2), jnp.float32)
    params2 = init_params(kp2, dl2, dr2)
    out2 = jax.block_until_ready(
        biaffine_forward(x_l2, x_r2, *params2, tile_r=128))
    ref2 = biaffine_ref(x_l2, x_r2, *params2)
    assert out2.shape == (B2, L2, R2)
    assert jnp.allclose(out2, ref2, atol=1e-4, rtol=1e-4), "mismatch vs reference (ragged)"

    print("KERNEL_OK")
</pallas_src>

<mosaic_0001>
module attributes {stable_mosaic.version = 11 : i64} {
  func.func @_biaffine_kernel(%arg0: i32, %arg1: i32, %arg2: i32, %arg3: memref<1x8x128xf32, #tpu.memory_space<vmem>>, %arg4: memref<1x128x128xf32, #tpu.memory_space<vmem>>, %arg5: memref<1x8x1xf32, #tpu.memory_space<vmem>>, %arg6: memref<1x1x128xf32, #tpu.memory_space<vmem>>, %arg7: memref<1x8x128xf32, #tpu.memory_space<vmem>>) attributes {dimension_semantics = [#tpu.dimension_semantics<parallel>, #tpu.dimension_semantics<parallel>, #tpu.dimension_semantics<parallel>], iteration_bounds = array<i64: 2, 1, 1>, scalar_prefetch = 0 : i64, scratch_operands = 0 : i64, tpu.core_type = #tpu.core_type<tc>, window_params = [{transform_indices = @transform_0, window_bounds = array<i64: 1, 8, 128>}, {transform_indices = @transform_1, window_bounds = array<i64: 1, 128, 128>}, {transform_indices = @transform_2, window_bounds = array<i64: 1, 8, 1>}, {transform_indices = @transform_3, window_bounds = array<i64: 1, 1, 128>}, {transform_indices = @transform_4, window_bounds = array<i64: 1, 8, 128>}]} {
    %c0 = arith.constant 0 : index
    %c0_0 = arith.constant 0 : index
    %c0_1 = arith.constant 0 : index
    %0 = vector.load %arg3[%c0, %c0_0, %c0_1] : memref<1x8x128xf32, #tpu.memory_space<vmem>>, vector<1x8x128xf32>
    %1 = vector.shape_cast %0 : vector<1x8x128xf32> to vector<8x128xf32>
    %c0_2 = arith.constant 0 : index
    %c0_3 = arith.constant 0 : index
    %c0_4 = arith.constant 0 : index
    %2 = vector.load %arg4[%c0_2, %c0_3, %c0_4] : memref<1x128x128xf32, #tpu.memory_space<vmem>>, vector<1x128x128xf32>
    %3 = vector.shape_cast %2 : vector<1x128x128xf32> to vector<128x128xf32>
    %cst = arith.constant dense<0.000000e+00> : vector<8x128xf32>
    %4 = tpu.matmul %1, %3, %cst {dimension_numbers = #tpu.dot_dimension_numbers<[1], [1], [0], [0], [0, 0, 1, 0], [], []>} : vector<8x128xf32>, vector<128x128xf32>, vector<8x128xf32> -> vector<8x128xf32>
    %c0_5 = arith.constant 0 : index
    %c0_6 = arith.constant 0 : index
    %c0_7 = arith.constant 0 : index
    %5 = vector.load %arg5[%c0_5, %c0_6, %c0_7] : memref<1x8x1xf32, #tpu.memory_space<vmem>>, vector<1x8x1xf32>
    %6 = vector.shape_cast %5 : vector<1x8x1xf32> to vector<8x1xf32>
    %7 = vector.broadcast %6 : vector<8x1xf32> to vector<8x128xf32>
    %8 = arith.addf %4, %7 : vector<8x128xf32>
    %c0_8 = arith.constant 0 : index
    %c0_9 = arith.constant 0 : index
    %c0_10 = arith.constant 0 : index
    %9 = vector.load %arg6[%c0_8, %c0_9, %c0_10] : memref<1x1x128xf32, #tpu.memory_space<vmem>>, vector<1x1x128xf32>
    %10 = vector.shape_cast %9 : vector<1x1x128xf32> to vector<1x128xf32>
    %11 = vector.broadcast %10 : vector<1x128xf32> to vector<8x128xf32>
    %12 = arith.addf %8, %11 : vector<8x128xf32>
    %c0_11 = arith.constant 0 : index
    %c0_12 = arith.constant 0 : index
    %c0_13 = arith.constant 0 : index
    %13 = vector.load %arg7[%c0_11, %c0_12, %c0_13] : memref<1x8x128xf32, #tpu.memory_space<vmem>>, vector<1x8x128xf32>
    %14 = vector.shape_cast %13 : vector<1x8x128xf32> to vector<8x128xf32>
    %15 = vector.shape_cast %12 : vector<8x128xf32> to vector<1x8x128xf32>
    tpu.vector_store %arg7[%c0_11, %c0_12, %c0_13], %15 {strides = array<i32>} : memref<1x8x128xf32, #tpu.memory_space<vmem>>, vector<1x8x128xf32>,
    return
  }
  func.func @transform_0(%arg0: i32, %arg1: i32, %arg2: i32) -> (i32, i32, i32) {
    %c0_i32 = arith.constant 0 : i32
    %c0_i32_0 = arith.constant 0 : i32
    return %arg0, %arg1, %c0_i32 : i32, i32, i32
  }
  func.func @transform_1(%arg0: i32, %arg1: i32, %arg2: i32) -> (i32, i32, i32) {
    %c0_i32 = arith.constant 0 : i32
    %c0_i32_0 = arith.constant 0 : i32
    return %arg0, %arg2, %c0_i32 : i32, i32, i32
  }
  func.func @transform_2(%arg0: i32, %arg1: i32, %arg2: i32) -> (i32, i32, i32) {
    %c0_i32 = arith.constant 0 : i32
    %c0_i32_0 = arith.constant 0 : i32
    return %arg0, %arg1, %c0_i32 : i32, i32, i32
  }
  func.func @transform_3(%arg0: i32, %arg1: i32, %arg2: i32) -> (i32, i32, i32) {
    %c0_i32 = arith.constant 0 : i32
    %c0_i32_0 = arith.constant 0 : i32
    return %arg0, %c0_i32, %arg2 : i32, i32, i32
  }
  func.func @transform_4(%arg0: i32, %arg1: i32, %arg2: i32) -> (i32, i32, i32) {
    %c0_i32 = arith.constant 0 : i32
    return %arg0, %arg1, %arg2 : i32, i32, i32
  }
}

</mosaic_0001>

<llo_original>
// kernel: biaffine_forward.1
$region0: #{biaffine_forward.1}
  #allocation0 [shape = 'u32[]', space=smem, size = 0x4, offset = 0x4, fixed_abs, tag = 'smem constant byte address 0x4 - core index']
  #allocation1 [shape = 'u32[144,128]{1,0:T(1,128)}', space=vmem, size = 0x12000, scoped, tag = 'internal scratch']
  %s0 = inlined_call_operand.vmem [shape: f32[2,8,128], index: 0, kind: input, shape index: {}]
  %s1 = inlined_call_operand.vmem [shape: f32[2,128,128], index: 1, kind: input, shape index: {}]
  %s2 = inlined_call_operand.vmem [shape: f32[2,8,1], index: 2, kind: input, shape index: {}]
  %s3 = inlined_call_operand.vmem [shape: f32[2,1,128], index: 3, kind: input, shape index: {}]
  %s4 = inlined_call_operand.hbm [shape: f32[2,8,128], index: 4, kind: output, shape index: {}]
  %s5 = sld [smem:[#allocation0]]
  $region49: #{biaffine_forward.1} parent=0
    _
  %s7 = ssub.s32 1, %s5
  %s8 = scalar_select 0, %s7, %s5
  $region1: #{biaffine_forward.1} parent=0
    #allocation2 [shape = 'u8[8192]{0}', space=vmem, size = 0x2000, scoped, tag = 'output window, operand 0']
    #allocation3 [shape = 's32[2]{0}', space=sflag, size = 0x8, scoped, tag = 'scoped memory for biaffine_forward.1']
    %9 = vsyncpa [#allocation3], 0
    %s10 = scalar_lea.sflag [#allocation3], 1
    %11 = vsyncpa %s10, 0
    loop: start=0, step=1, limit=4
    $region2: #{biaffine_forward.1} parent=1 // loop_pre_header
      _
    $region3: #{biaffine_forward.1} parent=1 // loop_header
      %s13 = sphi 0, %s17
      %p14 = scmp.ge.s32.totalorder %s13, 4
      %s20 = sphi 0, %s39
      %s21 = sphi 0, %s35
      %s22 = sphi 0, %s31
      %s23 = sphi 0, %s20
      %s24 = sphi 0, %s21
      %s25 = sphi 0, %s22
      %s26 = sphi 0, %s23
      %s27 = sphi 0, %s24
      %s28 = sphi 0, %s25
      %s44 = sphi 0, %s46
      %s47 = sphi 0, %s44
      %s48 = sphi 0, %s47
      %s64 = sphi 0, %s48
      %s72 = sphi 0, %s74
      %s75 = sphi 0, %s72
      %s76 = sphi 0, %s75
      %s92 = sphi 0, %s76
      %s100 = sphi 0, %s102
      %s103 = sphi 0, %s100
      %s104 = sphi 0, %s103
      %s120 = sphi 0, %s104
      %s128 = sphi 0, %s130
      %s131 = sphi 0, %s128
      %s132 = sphi 0, %s131
      %s148 = sphi 0, %s132
      %s158 = sphi 0, %s160
      %s161 = sphi 0, %s158
      %s162 = sphi 0, %s161
      %s178 = sphi 0, %s162
    $region4: #{biaffine_forward.1} parent=1 // loop_header_branch
      %16 = sbr.rel (%p14) target = $region8
    $region5: #{biaffine_forward.1} parent=1 // loop_body
      %s18 = ssub.s32 %s13, 1
      %s19 = ssub.s32 %s13, 2
      %s29 = sadd.s32 1, %s22
      %p30 = scmp.ge.s32.totalorder %s29, 1
      %s31 = scalar_select %p30, 0, %s29
      %s32 = sadd.s32 1, %s21
      %s33 = scalar_select %p30, %s32, %s21
      %p34 = scmp.ge.s32.totalorder %s33, 1
      %s35 = scalar_select %p34, 0, %s33
      %s36 = sadd.s32 1, %s20
      %s37 = scalar_select %p34, %s36, %s20
      %p38 = scmp.ge.s32.totalorder %s37, 2
      %s39 = scalar_select %p38, 0, %s37
      %s40 = ssub.s32 %s20, %s39
      %s41 = ssub.s32 %s21, %s35
      %s42 = sor.u32 %s40, %s41
      %p43 = scmp.eq.s32.totalorder %s42, 0
      %s45 = sadd.s32 %s44, 1
      %s46 = scalar_select %p43, %s44, %s45
      %p49 = pneg %p43
      %p50 = scmp.eq.s32.totalorder %s13, 1
      %p51 = por %p49, %p50
      %p52 = scmp.ne.s32.totalorder %s44, %s47
      %p53 = scmp.eq.s32.totalorder %s13, 0
      %p54 = por %p52, %p53
      %p55 = scmp.ne.s32.totalorder %s44, %s47
      %p56 = scmp.eq.s32.totalorder %s18, 1
      %p57 = por %p55, %p56
      %p58 = scmp.ne.s32.totalorder %s47, %s48
      %p59 = scmp.eq.s32.totalorder %s18, 0
      %p60 = por %p58, %p59
      %p61 = scmp.ne.s32.totalorder %s47, %s48
      %p62 = scmp.eq.s32.totalorder %s19, 1
      %p63 = por %p61, %p62
      %p65 = scmp.ne.s32.totalorder %s48, %s64
      %p66 = scmp.eq.s32.totalorder %s19, 0
      %p67 = por %p65, %p66
      %s68 = ssub.s32 %s20, %s39
      %s69 = ssub.s32 %s22, %s31
      %s70 = sor.u32 %s68, %s69
      %p71 = scmp.eq.s32.totalorder %s70, 0
      %s73 = sadd.s32 %s72, 1
      %s74 = scalar_select %p71, %s72, %s73
      %p77 = pneg %p71
      %p78 = scmp.eq.s32.totalorder %s13, 1
      %p79 = por %p77, %p78
      %p80 = scmp.ne.s32.totalorder %s72, %s75
      %p81 = scmp.eq.s32.totalorder %s13, 0
      %p82 = por %p80, %p81
      %p83 = scmp.ne.s32.totalorder %s72, %s75
      %p84 = scmp.eq.s32.totalorder %s18, 1
      %p85 = por %p83, %p84
      %p86 = scmp.ne.s32.totalorder %s75, %s76
      %p87 = scmp.eq.s32.totalorder %s18, 0
      %p88 = por %p86, %p87
      %p89 = scmp.ne.s32.totalorder %s75, %s76
      %p90 = scmp.eq.s32.totalorder %s19, 1
      %p91 = por %p89, %p90
      %p93 = scmp.ne.s32.totalorder %s76, %s92
      %p94 = scmp.eq.s32.totalorder %s19, 0
      %p95 = por %p93, %p94
      %s96 = ssub.s32 %s20, %s39
      %s97 = ssub.s32 %s21, %s35
      %s98 = sor.u32 %s96, %s97
      %p99 = scmp.eq.s32.totalorder %s98, 0
      %s101 = sadd.s32 %s100, 1
      %s102 = scalar_select %p99, %s100, %s101
      %p105 = pneg %p99
      %p106 = scmp.eq.s32.totalorder %s13, 1
      %p107 = por %p105, %p106
      %p108 = scmp.ne.s32.totalorder %s100, %s103
      %p109 = scmp.eq.s32.totalorder %s13, 0
      %p110 = por %p108, %p109
      %p111 = scmp.ne.s32.totalorder %s100, %s103
      %p112 = scmp.eq.s32.totalorder %s18, 1
      %p113 = por %p111, %p112
      %p114 = scmp.ne.s32.totalorder %s103, %s104
      %p115 = scmp.eq.s32.totalorder %s18, 0
      %p116 = por %p114, %p115
      %p117 = scmp.ne.s32.totalorder %s103, %s104
      %p118 = scmp.eq.s32.totalorder %s19, 1
      %p119 = por %p117, %p118
      %p121 = scmp.ne.s32.totalorder %s104, %s120
      %p122 = scmp.eq.s32.totalorder %s19, 0
      %p123 = por %p121, %p122
      %s124 = ssub.s32 %s20, %s39
      %s125 = ssub.s32 %s22, %s31
      %s126 = sor.u32 %s124, %s125
      %p127 = scmp.eq.s32.totalorder %s126, 0
      %s129 = sadd.s32 %s128, 1
      %s130 = scalar_select %p127, %s128, %s129
      %p133 = pneg %p127
      %p134 = scmp.eq.s32.totalorder %s13, 1
      %p135 = por %p133, %p134
      %p136 = scmp.ne.s32.totalorder %s128, %s131
      %p137 = scmp.eq.s32.totalorder %s13, 0
      %p138 = por %p136, %p137
      %p139 = scmp.ne.s32.totalorder %s128, %s131
      %p140 = scmp.eq.s32.totalorder %s18, 1
      %p141 = por %p139, %p140
      %p142 = scmp.ne.s32.totalorder %s131, %s132
      %p143 = scmp.eq.s32.totalorder %s18, 0
      %p144 = por %p142, %p143
      %p145 = scmp.ne.s32.totalorder %s131, %s132
      %p146 = scmp.eq.s32.totalorder %s19, 1
      %p147 = por %p145, %p146
      %p149 = scmp.ne.s32.totalorder %s132, %s148
      %p150 = scmp.eq.s32.totalorder %s19, 0
      %p151 = por %p149, %p150
      %s152 = ssub.s32 %s20, %s39
      %s153 = ssub.s32 %s21, %s35
      %s154 = sor.u32 %s152, %s153
      %s155 = ssub.s32 %s22, %s31
      %s156 = sor.u32 %s154, %s155
      %p157 = scmp.eq.s32.totalorder %s156, 0
      %s159 = sadd.s32 %s158, 1
      %s160 = scalar_select %p157, %s158, %s159
      %p163 = pneg %p157
      %p164 = scmp.eq.s32.totalorder %s13, 1
      %p165 = por %p163, %p164
      %p166 = scmp.ne.s32.totalorder %s158, %s161
      %p167 = scmp.eq.s32.totalorder %s13, 0
      %p168 = por %p166, %p167
      %p169 = scmp.ne.s32.totalorder %s158, %s161
      %p170 = scmp.eq.s32.totalorder %s18, 1
      %p171 = por %p169, %p170
      %p172 = scmp.ne.s32.totalorder %s161, %s162
      %p173 = scmp.eq.s32.totalorder %s18, 0
      %p174 = por %p172, %p173
      %p175 = scmp.ne.s32.totalorder %s161, %s162
      %p176 = scmp.eq.s32.totalorder %s19, 1
      %p177 = por %p175, %p176
      %p179 = scmp.ne.s32.totalorder %s162, %s178
      %p180 = scmp.eq.s32.totalorder %s19, 0
      %p181 = por %p179, %p180
      %p182 = scmp.le.s32.totalorder 1, %s13
      %p183 = scmp.lt.s32.totalorder %s13, 3
      %p184 = pnand %p182, %p183
      %p185 = pneg %p184
      // Predicated region
      $region9: #{biaffine_forward.1} parent=5 // pred_check
        _
      $region10: #{biaffine_forward.1} parent=5 // pred_check_branch
        %187 = sbr.rel (%p184) target = $region12
      $region11: #{biaffine_forward.1} parent=5 // pred_region
        %s188 = ssub.s32 %s13, 1
      $region12: #{biaffine_forward.1} parent=5 // pred_fallthru
        _
      %p189 = scmp.lt.s32.totalorder %s13, 2
      // Predicated region
      $region13: #{biaffine_forward.1} parent=5 // pred_check
        %p190 = pneg %p189
      $region14: #{biaffine_forward.1} parent=5 // pred_check_branch
        %192 = sbr.rel (%p190) target = $region16
      $region15: #{biaffine_forward.1} parent=5 // pred_region
        // Predicated region
        $region17: #{biaffine_forward.1} parent=15 // pred_check
          %p193 = pneg %p54
        $region18: #{biaffine_forward.1} parent=15 // pred_check_branch
          %195 = sbr.rel (%p193) target = $region20
        $region19: #{biaffine_forward.1} parent=15 // pred_region
          %p196 = scmp.lt.s32.totalorder %s20, 1
          %s197 = scalar_select %p196, %s20, 1
          %p198 = scmp.lt.s32.totalorder %s21, 0
          %s199 = scalar_select %p198, %s21, 0
          %s200 = sadd.s32 %s199, %s197
          %s201 = smul.addr %s200, 8
          %s202 = scalar_lea.vmem %s0, %s201
        $region20: #{biaffine_forward.1} parent=15 // pred_fallthru
          _
        // Predicated region
        $region21: #{biaffine_forward.1} parent=15 // pred_check
          %p203 = pneg %p82
        $region22: #{biaffine_forward.1} parent=15 // pred_check_branch
          %205 = sbr.rel (%p203) target = $region24
        $region23: #{biaffine_forward.1} parent=15 // pred_region
          %s206 = smul.u32 16, %s22
          %p207 = scmp.lt.s32.totalorder %s20, 1
          %s208 = scalar_select %p207, %s20, 1
          %p209 = scmp.lt.s32.totalorder %s206, 15
          %s210 = scalar_select %p209, %s206, 15
          %s211 = smul.addr %s208, 16
          %s212 = sadd.s32 %s210, %s211
          %s213 = smul.addr %s212, 8
          %s214 = scalar_lea.vmem %s1, %s213
          %s215 = smul.u32 16, %s22
        $region24: #{biaffine_forward.1} parent=15 // pred_fallthru
          _
        // Predicated region
        $region25: #{biaffine_forward.1} parent=15 // pred_check
          %p216 = pneg %p110
        $region26: #{biaffine_forward.1} parent=15 // pred_check_branch
          %218 = sbr.rel (%p216) target = $region28
        $region27: #{biaffine_forward.1} parent=15 // pred_region
          %p219 = scmp.lt.s32.totalorder %s20, 1
          %s220 = scalar_select %p219, %s20, 1
          %p221 = scmp.lt.s32.totalorder %s21, 0
          %s222 = scalar_select %p221, %s21, 0
          %s223 = sadd.s32 %s222, %s220
          %s224 = smul.addr %s223, 8
          %s225 = scalar_lea.vmem %s2, %s224
        $region28: #{biaffine_forward.1} parent=15 // pred_fallthru
          _
        // Predicated region
        $region29: #{biaffine_forward.1} parent=15 // pred_check
          %p226 = pneg %p138
        $region30: #{biaffine_forward.1} parent=15 // pred_check_branch
          %228 = sbr.rel (%p226) target = $region32
        $region31: #{biaffine_forward.1} parent=15 // pred_region
          %p229 = scmp.lt.s32.totalorder %s20, 1
          %s230 = scalar_select %p229, %s20, 1
          %p231 = scmp.lt.s32.totalorder %s22, 0
          %s232 = scalar_select %p231, %s22, 0
          %s233 = sadd.s32 %s232, %s230
          %s234 = scalar_lea.vmem %s3, %s233
        $region32: #{biaffine_forward.1} parent=15 // pred_fallthru
          _
      $region16: #{biaffine_forward.1} parent=5 // pred_fallthru
        _
      %p235 = scmp.le.s32.totalorder 1, %s13
      %p236 = scmp.lt.s32.totalorder %s13, 3
      %p237 = pnand %p235, %p236
      %p238 = pneg %p237
      // Predicated region
      $region33: #{biaffine_forward.1} parent=5 // pred_check
        _
      $region34: #{biaffine_forward.1} parent=5 // pred_check_branch
        %240 = sbr.rel (%p237) target = $region36
      $region35: #{biaffine_forward.1} parent=5 // pred_region
        %s241 = ssub.s32 %s13, 1
        %p242 = scmp.lt.s32.totalorder %s23, 1
        %s243 = scalar_select %p242, %s23, 1
        %p244 = scmp.lt.s32.totalorder %s24, 0
        %s245 = scalar_select %p244, %s24, 0
        %s246 = sadd.s32 %s245, %s243
        %s247 = smul.addr %s246, 8
        %s248 = scalar_lea.vmem %s0, %s247
        %p249 = pneg %p60
        %p250 = pneg %p57
        %s251 = smul.u32 16, %s25
        %p252 = scmp.lt.s32.totalorder %s23, 1
        %s253 = scalar_select %p252, %s23, 1
        %p254 = scmp.lt.s32.totalorder %s251, 15
        %s255 = scalar_select %p254, %s251, 15
        %s256 = smul.addr %s253, 16
        %s257 = sadd.s32 %s255, %s256
        %s258 = smul.addr %s257, 8
        %s259 = scalar_lea.vmem %s1, %s258
        %p260 = pneg %p88
        %p261 = pneg %p85
        %p262 = scmp.lt.s32.totalorder %s23, 1
        %s263 = scalar_select %p262, %s23, 1
        %p264 = scmp.lt.s32.totalorder %s24, 0
        %s265 = scalar_select %p264, %s24, 0
        %s266 = sadd.s32 %s265, %s263
        %s267 = smul.addr %s266, 8
        %s268 = scalar_lea.vmem %s2, %s267
        %p269 = pneg %p116
        %p270 = pneg %p113
        %p271 = scmp.lt.s32.totalorder %s23, 1
        %s272 = scalar_select %p271, %s23, 1
        %p273 = scmp.lt.s32.totalorder %s25, 0
        %s274 = scalar_select %p273, %s25, 0
        %s275 = sadd.s32 %s274, %s272
        %s276 = scalar_lea.vmem %s3, %s275
        %p277 = pneg %p144
        %p278 = pneg %p141
        %p279 = pneg %p174
        %p280 = pneg %p171
        %s281 = sand.u32 %s161, 1
        %s282 = scalar_lea.sflag [#allocation3], %s281
        %s283 = sand.u32 %s161, 1
        %s284 = smul.addr %s283, 8
        %s285 = scalar_lea.vmem [#allocation2], %s284
        %p286 = scmp.lt.s32.totalorder %s23, 1
        %s287 = scalar_select %p286, %s23, 1
        %p288 = scmp.lt.s32.totalorder %s24, 0
        %s289 = scalar_select %p288, %s24, 0
        %s290 = sadd.s32 %s289, %s287
        %s291 = smul.addr %s290, 8
        %s292 = scalar_lea.vmem %s0, %s291
        %s293 = smul.u32 16, %s25
        %p294 = scmp.lt.s32.totalorder %s23, 1
        %s295 = scalar_select %p294, %s23, 1
        %p296 = scmp.lt.s32.totalorder %s293, 15
        %s297 = scalar_select %p296, %s293, 15
        %s298 = smul.addr %s295, 16
        %s299 = sadd.s32 %s297, %s298
        %s300 = smul.addr %s299, 8
        %s301 = scalar_lea.vmem %s1, %s300
        %s302 = smul.u32 16, %s25
        %p303 = scmp.lt.s32.totalorder %s23, 1
        %s304 = scalar_select %p303, %s23, 1
        %p305 = scmp.lt.s32.totalorder %s24, 0
        %s306 = scalar_select %p305, %s24, 0
        %s307 = sadd.s32 %s306, %s304
        %s308 = smul.addr %s307, 8
        %s309 = scalar_lea.vmem %s2, %s308
        %p310 = scmp.lt.s32.totalorder %s23, 1
        %s311 = scalar_select %p310, %s23, 1
        %p312 = scmp.lt.s32.totalorder %s25, 0
        %s313 = scalar_select %p312, %s25, 0
        %s314 = sadd.s32 %s313, %s311
        %s315 = scalar_lea.vmem %s3, %s314
        %v316 = vld [vmem:[%s292] sm:$0xff]
        %v317 = vld [vmem:[%s301] sm:$0xff]
        %v318 = vld [vmem:[%s301 + $0x8] sm:$0xff]
        %v319 = vld [vmem:[%s301 + $0x10] sm:$0xff]
        %v320 = vld [vmem:[%s301 + $0x18] sm:$0xff]
        %v321 = vld [vmem:[%s301 + $0x20] sm:$0xff]
        %v322 = vld [vmem:[%s301 + $0x28] sm:$0xff]
        %v323 = vld [vmem:[%s301 + $0x30] sm:$0xff]
        %v324 = vld [vmem:[%s301 + $0x38] sm:$0xff]
        %v325 = vld [vmem:[%s301 + $0x40] sm:$0xff]
        %v326 = vld [vmem:[%s301 + $0x48] sm:$0xff]
        %v327 = vld [vmem:[%s301 + $0x50] sm:$0xff]
        %v328 = vld [vmem:[%s301 + $0x58] sm:$0xff]
        %v329 = vld [vmem:[%s301 + $0x60] sm:$0xff]
        %v330 = vld [vmem:[%s301 + $0x68] sm:$0xff]
        %v331 = vld [vmem:[%s301 + $0x70] sm:$0xff]
        %v332 = vld [vmem:[%s301 + $0x78] sm:$0xff]
        %v333 = vld [vmem:[%s309] sm:$0xff]
        %335 = vset.pattern.permute.xlu0 0
        %336 = vperm.xlu0 %335, %v333
        %v337 = vpop.permute.xlu0 %336
        %339 = vmatprep.subr.mxu0 0.0
        %340 = vmatpush1.xpose.msra.mxu0 %v317
        %341 = vmatprep.subr.mxu0 0.0
        %342 = vmatpush1.xpose.msra.mxu0 %v318
        %343 = vmatprep.subr.mxu0 0.0
        %344 = vmatpush1.xpose.msra.mxu0 %v319
        %345 = vmatprep.subr.mxu0 0.0
        %346 = vmatpush1.xpose.msra.mxu0 %v320
        %347 = vmatprep.subr.mxu0 0.0
        %348 = vmatpush1.xpose.msra.mxu0 %v321
        %349 = vmatprep.subr.mxu0 0.0
        %350 = vmatpush1.xpose.msra.mxu0 %v322
        %351 = vmatprep.subr.mxu0 0.0
        %352 = vmatpush1.xpose.msra.mxu0 %v323
        %353 = vmatprep.subr.mxu0 0.0
        %354 = vmatpush1.xpose.msra.mxu0 %v324
        %355 = vmatprep.subr.mxu0 0.0
        %356 = vmatpush1.xpose.msra.mxu0 %v325
        %357 = vmatprep.subr.mxu0 0.0
        %358 = vmatpush1.xpose.msra.mxu0 %v326
        %359 = vmatprep.subr.mxu0 0.0
        %360 = vmatpush1.xpose.msra.mxu0 %v327
        %361 = vmatprep.subr.mxu0 0.0
        %362 = vmatpush1.xpose.msra.mxu0 %v328
        %363 = vmatprep.subr.mxu0 0.0
        %364 = vmatpush1.xpose.msra.mxu0 %v329
        %365 = vmatprep.subr.mxu0 0.0
        %366 = vmatpush1.xpose.msra.mxu0 %v330
        %367 = vmatprep.subr.mxu0 0.0
        %368 = vmatpush1.xpose.msra.mxu0 %v331
        %369 = vmatprep.subr.mxu0 0.0
        %370 = vmatpush1.xpose.msra.mxu0 %v332
        %371 = vmatprep.subr.mxu0 0.0
        %372 = vmatpush1.xpose.msra.mxu0 0.0
        %373 = vmatprep.subr.mxu0 0.0
        %374 = vmatpush1.xpose.msra.mxu0 0.0
        %375 = vmatprep.subr.mxu0 0.0
        %376 = vmatpush1.xpose.msra.mxu0 0.0
        %377 = vmatprep.subr.mxu0 0.0
        %378 = vmatpush1.xpose.msra.mxu0 0.0
        %379 = vmatprep.subr.mxu0 0.0
        %380 = vmatpush1.xpose.msra.mxu0 0.0
        %381 = vmatprep.subr.mxu0 0.0
        %382 = vmatpush1.xpose.msra.mxu0 0.0
        %383 = vmatprep.subr.mxu0 0.0
        %384 = vmatpush1.xpose.msra.mxu0 0.0
        %385 = vmatprep.subr.mxu0 0.0
        %386 = vmatpush1.xpose.msra.mxu0 0.0
        %387 = vmatprep.subr.mxu0 0.0
        %388 = vmatpush1.xpose.msra.mxu0 0.0
        %389 = vmatprep.subr.mxu0 0.0
        %390 = vmatpush1.xpose.msra.mxu0 0.0
        %391 = vmatprep.subr.mxu0 0.0
        %392 = vmatpush1.xpose.msra.mxu0 0.0
        %393 = vmatprep.subr.mxu0 0.0
        %394 = vmatpush1.xpose.msra.mxu0 0.0
        %395 = vmatprep.subr.mxu0 0.0
        %396 = vmatpush1.xpose.msra.mxu0 0.0
        %397 = vmatprep.subr.mxu0 0.0
        %398 = vmatpush1.xpose.msra.mxu0 0.0
        %399 = vmatprep.subr.mxu0 0.0
        %400 = vmatpush1.xpose.msra.mxu0 0.0
        %401 = vmatprep.subr.mxu0 0.0
        %402 = vmatpush1.xpose.msra.mxu0 0.0
        %403 = vmatprep.mubr.f32.mxu0 0.0
        %404 = vmatmul.mubr.f32.gmra.mrb[0].mxu0 %v316
        %v405 = vpop.f32.mrb[0].mxu0
        %v406 = vadd.f32 %v337, %v405
        %v407 = vpop.f32.mrb[0].mxu0
        %408 = vdwg.mxu0
        %v409 = vld [vmem:[%s315] sm:$0x1]
        %v411 = vlaneseq
        %v412 = vshrl.u32 %v411, 7
        %v413 = vsub.s32 0, %v412
        %v414 = vrot.slane %v409, %v413
        %v416 = vadd.f32 %v406, %v414
        %417 = vst [vmem:[%s285] sm:$0xff] %v416
        %s418 = sand.u32 %s161, 1
        %s419 = scalar_lea.sflag [#allocation3], %s418
        %s420 = sand.u32 %s161, 1
        %s421 = smul.addr %s420, 8
        %s422 = scalar_lea.vmem [#allocation2], %s421
        // Predicated region
        $region37: #{biaffine_forward.1} parent=35 // pred_check
          %p423 = pneg %p171
        $region38: #{biaffine_forward.1} parent=35 // pred_check_branch
          %425 = sbr.rel (%p423) target = $region40
        $region39: #{biaffine_forward.1} parent=35 // pred_region
          %s427 = ssub.s32 128, 128
          %428 = vsyncadd %s419, %s427
          %s429 = sadd.s32 %s25, %s24
          %s430 = sadd.s32 %s429, %s23
          %s431 = smul.addr %s430, 128
          %s432 = scalar_lea.hbm %s4, %s431
          %s434 = sshll.u32 %s422, 4
          %s435 = int_to_ptr.vmem [resolvable:$true] %s434
          %437 = dma.vmem_to_hbm [thread:$0]  %s435, 128, %s432, %s419
        $region40: #{biaffine_forward.1} parent=35 // pred_fallthru
          _
      $region36: #{biaffine_forward.1} parent=5 // pred_fallthru
        _
      %p438 = scmp.le.s32.totalorder 2, %s13
      // Predicated region
      $region41: #{biaffine_forward.1} parent=5 // pred_check
        %p439 = pneg %p438
      $region42: #{biaffine_forward.1} parent=5 // pred_check_branch
        %441 = sbr.rel (%p439) target = $region44
      $region43: #{biaffine_forward.1} parent=5 // pred_region
        %s442 = ssub.s32 %s13, 2
        // Predicated region
        $region45: #{biaffine_forward.1} parent=43 // pred_check
          %p443 = pneg %p177
        $region46: #{biaffine_forward.1} parent=43 // pred_check_branch
          %445 = sbr.rel (%p443) target = $region48
        $region47: #{biaffine_forward.1} parent=43 // pred_region
          %s446 = sand.u32 %s162, 1
          %s447 = scalar_lea.sflag [#allocation3], %s446
          %s448 = sand.u32 %s162, 1
          %s449 = smul.addr %s448, 8
          %s450 = scalar_lea.vmem [#allocation2], %s449
          %451 = dma.done %s447, 128
        $region48: #{biaffine_forward.1} parent=43 // pred_fallthru
          _
      $region44: #{biaffine_forward.1} parent=5 // pred_fallthru
        _
    $region6: #{biaffine_forward.1} parent=1 // loop_footer
      %s17 = sadd.s32 1, %s13
    $region7: #{biaffine_forward.1} parent=1 // loop_footer_branch
      %12 = sbr.rel target = $region3
    $region8: #{biaffine_forward.1} parent=1 // loop_exit
      _
    %452 = vsyncpa [#allocation3], 1
    %s453 = scalar_lea.sflag [#allocation3], 1
    %454 = vsyncpa %s453, 1

</llo_original>
